<compile_context>
chip_gen: v7x
topology: tpu7x:2x2x1
jax: 0.10.0
libtpu: 0.0.40
codegen_flags: <defaults>
</compile_context>

<pallas_src>
import functools

import jax
import jax.numpy as jnp
from jax.experimental import pallas as pl
from jax.experimental.pallas import tpu as pltpu


# --------------------------------------------------------------------------
# Kernel
# --------------------------------------------------------------------------
def cvae_kernel(xy_ref, eps_ref, ph_ref, phead_ref, pout_ref, out_ref, *,
                d_xy, hidden, latent, off_h, off_head, off_out):
    xy = xy_ref[...]                 # (bm, input_dim + output_dim)
    eps = eps_ref[...]               # (bm, latent)

    # encoder: h = ReLU([x|y] @ W1 + b1)  (concat done once in the caller)
    w1 = ph_ref[off_h["w1"]:off_h["w1"] + d_xy, :]
    b1 = ph_ref[off_h["b1"]:off_h["b1"] + 1, :]
    h = jnp.dot(xy, w1, preferred_element_type=jnp.float32) + b1
    h = jnp.maximum(h, 0.0)

    # fused mu/logvar head: one matmul -> [mu | logvar] along lanes
    whead = phead_ref[off_head["whead"]:off_head["whead"] + hidden, :]
    bhead = phead_ref[off_head["bhead"]:off_head["bhead"] + 1, :]
    muvar = jnp.dot(h, whead, preferred_element_type=jnp.float32) + bhead
    mu = muvar[:, :latent]
    logvar = muvar[:, latent:]

    # reparameterize: z = mu + eps * exp(0.5 * logvar)
    z = mu + eps * jnp.exp(0.5 * logvar)

    # decoder: ReLU(xy @ W3xy + z @ W3z + b3) @ W4 + b4
    # (W3xy has zero rows for the y columns -> no lane slice of the xy tile)
    w3xy = ph_ref[off_h["w3xy"]:off_h["w3xy"] + d_xy, :]
    w3z = ph_ref[off_h["w3z"]:off_h["w3z"] + latent, :]
    b3 = ph_ref[off_h["b3"]:off_h["b3"] + 1, :]
    h2 = (jnp.dot(xy, w3xy, preferred_element_type=jnp.float32)
          + jnp.dot(z, w3z, preferred_element_type=jnp.float32) + b3)
    h2 = jnp.maximum(h2, 0.0)

    w4 = pout_ref[off_out["w4"]:off_out["w4"] + hidden, :]
    b4 = pout_ref[off_out["b4"]:off_out["b4"] + 1, :]
    yrec = jnp.dot(h2, w4, preferred_element_type=jnp.float32) + b4

    # packed output [mu | logvar | y_recon]: two direct partial stores
    out_ref[:, :2 * latent] = muvar
    out_ref[:, 2 * latent:] = yrec


# --------------------------------------------------------------------------
# One-time parameter packing (hoisted out of the hot path)
# --------------------------------------------------------------------------
def _pack_rows(named_arrays):
    """Stack same-width arrays along rows; pad each section to a multiple of 8
    rows (sublane-aligned static slices in the kernel).  Returns (slab, offsets)."""
    offs, chunks, row = {}, [], 0
    for name, a in named_arrays:
        offs[name] = row
        pad = (-a.shape[0]) % 8
        if pad:
            a = jnp.concatenate([a, jnp.zeros((pad, a.shape[1]), a.dtype)], axis=0)
        chunks.append(a)
        row += a.shape[0]
    return jnp.concatenate(chunks, axis=0), offs


def prepare_params(params, input_dim, output_dim):
    """Pack the 10 Linear weights/biases into 3 lane-grouped slabs + static geometry."""
    hidden = params["w1"].shape[1]
    latent = params["wmu"].shape[1]
    d_xy = input_dim + output_dim

    # decoder[0]: split along fan-in, and fold the x-slice into a d_xy-row
    # weight whose y-rows are zero so the kernel contracts the resident xy tile.
    w3 = params["w3"]
    w3xy = jnp.zeros((d_xy, hidden), w3.dtype).at[:input_dim, :].set(w3[:input_dim])
    w3z = w3[input_dim:]

    # fuse mu / logvar heads -> one matmul
    whead = jnp.concatenate([params["wmu"], params["wlv"]], axis=1)
    bhead = jnp.concatenate([params["bmu"], params["blv"]], axis=1)

    p_h, off_h = _pack_rows([("w1", params["w1"]), ("b1", params["b1"]),
                             ("w3xy", w3xy), ("w3z", w3z), ("b3", params["b3"])])
    p_head, off_head = _pack_rows([("whead", whead), ("bhead", bhead)])
    p_out, off_out = _pack_rows([("w4", params["w4"]), ("b4", params["b4"])])

    geom = dict(d_xy=d_xy, input_dim=input_dim, output_dim=output_dim,
                hidden_dim=hidden, latent_dim=latent,
                off_h=off_h, off_head=off_head, off_out=off_out)
    return {"p_h": p_h, "p_head": p_head, "p_out": p_out, "geom": geom}


# --------------------------------------------------------------------------
# Tiling policy
# --------------------------------------------------------------------------
def _pick_bm(B, row_bytes, *, num_cores=1, vmem_budget_bytes=8 << 20):
    """Batch tile size.  Default: a single grid step (bm == B) -- v5e/v6e have
    one TensorCore, so splitting only adds per-step pipeline overhead.  Split
    only when (a) num_cores > 1 (v7x megacore) AND the batch is big enough to
    amortize the extra steps, or (b) the batch tile would blow the VMEM budget."""
    max_rows = max(8, (vmem_budget_bytes // max(row_bytes, 1)) // 8 * 8)
    steps = 1
    if num_cores > 1 and B >= 128 * num_cores:
        steps = num_cores
    if B > max_rows:
        steps = max(steps, -(-B // max_rows))
    if steps == 1:
        return B
    bm = -(-B // steps)
    bm = -(-bm // 8) * 8
    while bm < B and B % bm:
        bm += 8
    return min(bm, B)


# --------------------------------------------------------------------------
# Wrapper
# --------------------------------------------------------------------------
def cvae_forward(x, y, eps, prepped, *, bm=None, num_cores=1):
    B, input_dim = x.shape
    output_dim = y.shape[1]
    g = prepped["geom"]
    d_xy, hidden, latent = g["d_xy"], g["hidden_dim"], g["latent_dim"]
    assert input_dim == g["input_dim"] and output_dim == g["output_dim"]
    packed_dim = output_dim + 2 * latent

    # per-call concat, matching torch.cat([x, y], dim=1) in forward()
    xy = jnp.concatenate([x, y], axis=1)

    if bm is None:
        row_bytes = 2 * 4 * (d_xy + latent + packed_dim)   # double-buffered streams
        bm = _pick_bm(B, row_bytes, num_cores=num_cores)
    assert B % bm == 0, (B, bm)
    nsteps = B // bm

    row = lambda i: (i, 0)          # batch-tiled operands
    inv = lambda i: (0, 0)          # grid-invariant weight slabs

    def full_spec(a):
        return pl.BlockSpec(a.shape, inv)

    kernel = functools.partial(
        cvae_kernel,
        d_xy=d_xy, hidden=hidden, latent=latent,
        off_h=g["off_h"], off_head=g["off_head"], off_out=g["off_out"])

    packed = pl.pallas_call(
        kernel,
        out_shape=jax.ShapeDtypeStruct((B, packed_dim), jnp.float32),
        grid_spec=pltpu.PrefetchScalarGridSpec(
            num_scalar_prefetch=0,
            grid=(nsteps,),
            in_specs=[
                pl.BlockSpec((bm, d_xy), row),      # xy
                pl.BlockSpec((bm, latent), row),    # eps
                full_spec(prepped["p_h"]),          # [w1;b1;w3xy;w3z;b3]
                full_spec(prepped["p_head"]),       # [whead;bhead]
                full_spec(prepped["p_out"]),        # [w4;b4]
            ],
            out_specs=pl.BlockSpec((bm, packed_dim), row),
        ),
        compiler_params=pltpu.CompilerParams(
            dimension_semantics=("parallel",) if nsteps > 1 else ("arbitrary",)),
    )(xy, eps, prepped["p_h"], prepped["p_head"], prepped["p_out"])

    mu = packed[:, :latent]
    logvar = packed[:, latent:2 * latent]
    y_recon = packed[:, 2 * latent:]
    return y_recon, mu, logvar


# --------------------------------------------------------------------------
# Params / reference
# --------------------------------------------------------------------------
def init_params(key, input_dim, output_dim, hidden_dim, latent_dim):
    """Deterministic synthetic init (PyTorch-style uniform(-1/sqrt(fan_in), ...))."""
    keys = jax.random.split(key, 10)

    def lin(kw, kb, fan_in, fan_out):
        bound = 1.0 / jnp.sqrt(fan_in)
        w = jax.random.uniform(kw, (fan_in, fan_out), jnp.float32, -bound, bound)
        b = jax.random.uniform(kb, (1, fan_out), jnp.float32, -bound, bound)
        return w, b

    w1, b1 = lin(keys[0], keys[1], input_dim + output_dim, hidden_dim)   # encoder
    wmu, bmu = lin(keys[2], keys[3], hidden_dim, latent_dim)             # fc_mu
    wlv, blv = lin(keys[4], keys[5], hidden_dim, latent_dim)             # fc_logvar
    w3, b3 = lin(keys[6], keys[7], input_dim + latent_dim, hidden_dim)   # decoder[0]
    w4, b4 = lin(keys[8], keys[9], hidden_dim, output_dim)               # decoder[2]

    return {"w1": w1, "b1": b1, "wmu": wmu, "bmu": bmu, "wlv": wlv, "blv": blv,
            "w3": w3, "b3": b3, "w4": w4, "b4": b4}


def cvae_reference(x, y, eps, p):
    """Pure-JAX reference mirroring the PyTorch module's forward."""
    h = jnp.maximum(jnp.concatenate([x, y], axis=1) @ p["w1"] + p["b1"], 0.0)
    mu = h @ p["wmu"] + p["bmu"]
    logvar = h @ p["wlv"] + p["blv"]
    z = mu + eps * jnp.exp(0.5 * logvar)
    h2 = jnp.maximum(jnp.concatenate([x, z], axis=1) @ p["w3"] + p["b3"], 0.0)
    y_recon = h2 @ p["w4"] + p["b4"]
    return y_recon, mu, logvar


if __name__ == "__main__":
    # Small shapes consistent with the module's forward:
    #   x: [B, input_dim], y: [B, output_dim]
    B, input_dim, output_dim, hidden_dim, latent_dim = 64, 16, 8, 32, 8

    key = jax.random.PRNGKey(0)
    kx, ky, keps, kp = jax.random.split(key, 4)
    x = jax.random.normal(kx, (B, input_dim), jnp.float32)
    y = jax.random.normal(ky, (B, output_dim), jnp.float32)
    eps = jax.random.normal(keps, (B, latent_dim), jnp.float32)  # torch.randn_like(std)

    params = init_params(kp, input_dim, output_dim, hidden_dim, latent_dim)
    prepped = prepare_params(params, input_dim, output_dim)       # one-time packing

    y_recon, mu, logvar = cvae_forward(x, y, eps, prepped)        # bm = B -> grid=(1,)
    jax.block_until_ready((y_recon, mu, logvar))

    # Validate against the pure-JAX reference.  Tolerances allow for MXU
    # default-precision f32 matmuls differing slightly from XLA's lowering.
    yr_ref, mu_ref, lv_ref = cvae_reference(x, y, eps, params)
    assert jnp.allclose(mu, mu_ref, atol=5e-3, rtol=5e-3)
    assert jnp.allclose(logvar, lv_ref, atol=5e-3, rtol=5e-3)
    assert jnp.allclose(y_recon, yr_ref, atol=5e-3, rtol=5e-3)

    print("KERNEL_OK")
</pallas_src>

<mosaic_0001>
module attributes {stable_mosaic.version = 11 : i64} {
  func.func @cvae_kernel(%arg0: i32, %arg1: memref<64x24xf32, #tpu.memory_space<vmem>>, %arg2: memref<64x8xf32, #tpu.memory_space<vmem>>, %arg3: memref<72x32xf32, #tpu.memory_space<vmem>>, %arg4: memref<40x16xf32, #tpu.memory_space<vmem>>, %arg5: memref<40x8xf32, #tpu.memory_space<vmem>>, %arg6: memref<64x24xf32, #tpu.memory_space<vmem>>) attributes {dimension_semantics = [#tpu.dimension_semantics<arbitrary>], iteration_bounds = array<i64: 1>, scalar_prefetch = 0 : i64, scratch_operands = 0 : i64, tpu.core_type = #tpu.core_type<tc>, window_params = [{transform_indices = @transform_0, window_bounds = array<i64: 64, 24>}, {transform_indices = @transform_1, window_bounds = array<i64: 64, 8>}, {pipeline_mode = #tpu.pipeline_mode<synchronous>, transform_indices = @transform_2, window_bounds = array<i64: 72, 32>}, {pipeline_mode = #tpu.pipeline_mode<synchronous>, transform_indices = @transform_3, window_bounds = array<i64: 40, 16>}, {pipeline_mode = #tpu.pipeline_mode<synchronous>, transform_indices = @transform_4, window_bounds = array<i64: 40, 8>}, {transform_indices = @transform_5, window_bounds = array<i64: 64, 24>}]} {
    %c0 = arith.constant 0 : index
    %c0_0 = arith.constant 0 : index
    %0 = vector.load %arg1[%c0, %c0_0] : memref<64x24xf32, #tpu.memory_space<vmem>>, vector<64x24xf32>
    %c0_1 = arith.constant 0 : index
    %c0_2 = arith.constant 0 : index
    %1 = vector.load %arg2[%c0_1, %c0_2] : memref<64x8xf32, #tpu.memory_space<vmem>>, vector<64x8xf32>
    %c0_3 = arith.constant 0 : index
    %c0_4 = arith.constant 0 : index
    %2 = vector.load %arg3[%c0_3, %c0_4] : memref<72x32xf32, #tpu.memory_space<vmem>>, vector<24x32xf32>
    %c24 = arith.constant 24 : index
    %c0_5 = arith.constant 0 : index
    %3 = vector.load %arg3[%c24, %c0_5] : memref<72x32xf32, #tpu.memory_space<vmem>>, vector<1x32xf32>
    %cst = arith.constant dense<0.000000e+00> : vector<64x32xf32>
    %4 = tpu.matmul %0, %2, %cst {dimension_numbers = #tpu.dot_dimension_numbers<[1], [0], [0], [1], [0, 0, 1, 1], [], []>} : vector<64x24xf32>, vector<24x32xf32>, vector<64x32xf32> -> vector<64x32xf32>
    %5 = vector.broadcast %3 : vector<1x32xf32> to vector<64x32xf32>
    %6 = arith.addf %4, %5 : vector<64x32xf32>
    %cst_6 = arith.constant 0.000000e+00 : f32
    %7 = vector.broadcast %cst_6 : f32 to vector<64x32xf32>
    %8 = arith.maximumf %6, %7 : vector<64x32xf32>
    %c0_7 = arith.constant 0 : index
    %c0_8 = arith.constant 0 : index
    %9 = vector.load %arg4[%c0_7, %c0_8] : memref<40x16xf32, #tpu.memory_space<vmem>>, vector<32x16xf32>
    %c32 = arith.constant 32 : index
    %c0_9 = arith.constant 0 : index
    %10 = vector.load %arg4[%c32, %c0_9] : memref<40x16xf32, #tpu.memory_space<vmem>>, vector<1x16xf32>
    %cst_10 = arith.constant dense<0.000000e+00> : vector<64x16xf32>
    %11 = tpu.matmul %8, %9, %cst_10 {dimension_numbers = #tpu.dot_dimension_numbers<[1], [0], [0], [1], [0, 0, 1, 1], [], []>} : vector<64x32xf32>, vector<32x16xf32>, vector<64x16xf32> -> vector<64x16xf32>
    %12 = vector.broadcast %10 : vector<1x16xf32> to vector<64x16xf32>
    %13 = arith.addf %11, %12 : vector<64x16xf32>
    %14 = vector.extract_strided_slice %13 {offsets = [0, 0], sizes = [64, 8], strides = [1, 1]} : vector<64x16xf32> to vector<64x8xf32>
    %15 = vector.extract_strided_slice %13 {offsets = [0, 8], sizes = [64, 8], strides = [1, 1]} : vector<64x16xf32> to vector<64x8xf32>
    %cst_11 = arith.constant 5.000000e-01 : f32
    %16 = vector.broadcast %cst_11 : f32 to vector<64x8xf32>
    %17 = arith.mulf %16, %15 : vector<64x8xf32>
    %18 = math.exp %17 : vector<64x8xf32>
    %19 = arith.mulf %1, %18 : vector<64x8xf32>
    %20 = arith.addf %14, %19 : vector<64x8xf32>
    %c32_12 = arith.constant 32 : index
    %c0_13 = arith.constant 0 : index
    %21 = vector.load %arg3[%c32_12, %c0_13] : memref<72x32xf32, #tpu.memory_space<vmem>>, vector<24x32xf32>
    %c56 = arith.constant 56 : index
    %c0_14 = arith.constant 0 : index
    %22 = vector.load %arg3[%c56, %c0_14] : memref<72x32xf32, #tpu.memory_space<vmem>>, vector<8x32xf32>
    %c64 = arith.constant 64 : index
    %c0_15 = arith.constant 0 : index
    %23 = vector.load %arg3[%c64, %c0_15] : memref<72x32xf32, #tpu.memory_space<vmem>>, vector<1x32xf32>
    %cst_16 = arith.constant dense<0.000000e+00> : vector<64x32xf32>
    %24 = tpu.matmul %0, %21, %cst_16 {dimension_numbers = #tpu.dot_dimension_numbers<[1], [0], [0], [1], [0, 0, 1, 1], [], []>} : vector<64x24xf32>, vector<24x32xf32>, vector<64x32xf32> -> vector<64x32xf32>
    %cst_17 = arith.constant dense<0.000000e+00> : vector<64x32xf32>
    %25 = tpu.matmul %20, %22, %cst_17 {dimension_numbers = #tpu.dot_dimension_numbers<[1], [0], [0], [1], [0, 0, 1, 1], [], []>} : vector<64x8xf32>, vector<8x32xf32>, vector<64x32xf32> -> vector<64x32xf32>
    %26 = arith.addf %24, %25 : vector<64x32xf32>
    %27 = vector.broadcast %23 : vector<1x32xf32> to vector<64x32xf32>
    %28 = arith.addf %26, %27 : vector<64x32xf32>
    %cst_18 = arith.constant 0.000000e+00 : f32
    %29 = vector.broadcast %cst_18 : f32 to vector<64x32xf32>
    %30 = arith.maximumf %28, %29 : vector<64x32xf32>
    %c0_19 = arith.constant 0 : index
    %c0_20 = arith.constant 0 : index
    %31 = vector.load %arg5[%c0_19, %c0_20] : memref<40x8xf32, #tpu.memory_space<vmem>>, vector<32x8xf32>
    %c32_21 = arith.constant 32 : index
    %c0_22 = arith.constant 0 : index
    %32 = vector.load %arg5[%c32_21, %c0_22] : memref<40x8xf32, #tpu.memory_space<vmem>>, vector<1x8xf32>
    %cst_23 = arith.constant dense<0.000000e+00> : vector<64x8xf32>
    %33 = tpu.matmul %30, %31, %cst_23 {dimension_numbers = #tpu.dot_dimension_numbers<[1], [0], [0], [1], [0, 0, 1, 1], [], []>} : vector<64x32xf32>, vector<32x8xf32>, vector<64x8xf32> -> vector<64x8xf32>
    %34 = vector.broadcast %32 : vector<1x8xf32> to vector<64x8xf32>
    %35 = arith.addf %33, %34 : vector<64x8xf32>
    %c0_24 = arith.constant 0 : index
    %c0_25 = arith.constant 0 : index
    %36 = vector.load %arg6[%c0_24, %c0_25] : memref<64x24xf32, #tpu.memory_space<vmem>>, vector<64x16xf32>
    tpu.vector_store %arg6[%c0_24, %c0_25], %13 {strides = array<i32>} : memref<64x24xf32, #tpu.memory_space<vmem>>, vector<64x16xf32>,
    %c0_26 = arith.constant 0 : index
    %c16 = arith.constant 16 : index
    %37 = vector.load %arg6[%c0_26, %c16] : memref<64x24xf32, #tpu.memory_space<vmem>>, vector<64x8xf32>
    tpu.vector_store %arg6[%c0_26, %c16], %35 {strides = array<i32>} : memref<64x24xf32, #tpu.memory_space<vmem>>, vector<64x8xf32>,
    return
  }
  func.func @transform_0(%arg0: i32) -> (i32, i32) {
    %c0_i32 = arith.constant 0 : i32
    %c0_i32_0 = arith.constant 0 : i32
    return %arg0, %c0_i32 : i32, i32
  }
  func.func @transform_1(%arg0: i32) -> (i32, i32) {
    %c0_i32 = arith.constant 0 : i32
    %c0_i32_0 = arith.constant 0 : i32
    return %arg0, %c0_i32 : i32, i32
  }
  func.func @transform_2(%arg0: i32) -> (i32, i32) {
    %c0_i32 = arith.constant 0 : i32
    %c0_i32_0 = arith.constant 0 : i32
    %c0_i32_1 = arith.constant 0 : i32
    return %c0_i32, %c0_i32_0 : i32, i32
  }
  func.func @transform_3(%arg0: i32) -> (i32, i32) {
    %c0_i32 = arith.constant 0 : i32
    %c0_i32_0 = arith.constant 0 : i32
    %c0_i32_1 = arith.constant 0 : i32
    return %c0_i32, %c0_i32_0 : i32, i32
  }
  func.func @transform_4(%arg0: i32) -> (i32, i32) {
    %c0_i32 = arith.constant 0 : i32
    %c0_i32_0 = arith.constant 0 : i32
    %c0_i32_1 = arith.constant 0 : i32
    return %c0_i32, %c0_i32_0 : i32, i32
  }
  func.func @transform_5(%arg0: i32) -> (i32, i32) {
    %c0_i32 = arith.constant 0 : i32
    %c0_i32_0 = arith.constant 0 : i32
    return %arg0, %c0_i32 : i32, i32
  }
}

</mosaic_0001>

<llo_original>
// kernel: tpu_custom_call.1
$region0: #{tpu_custom_call.1}
  #allocation0 [shape = 'u32[]', space=smem, size = 0x4, offset = 0x4, fixed_abs, tag = 'smem constant byte address 0x4 - core index']
  #allocation1 [shape = 'u32[144,128]{1,0:T(1,128)}', space=vmem, size = 0x12000, scoped, tag = 'internal scratch']
  %s0 = inlined_call_operand.vmem [shape: f32[64,24], index: 0, kind: input, shape index: {}]
  %s1 = inlined_call_operand.vmem [shape: f32[64,8], index: 1, kind: input, shape index: {}]
  %s2 = inlined_call_operand.vmem [shape: f32[72,32], index: 2, kind: input, shape index: {}]
  %s3 = inlined_call_operand.vmem [shape: f32[40,16], index: 3, kind: input, shape index: {}]
  %s4 = inlined_call_operand.vmem [shape: f32[40,8], index: 4, kind: input, shape index: {}]
  %s5 = inlined_call_operand.vmem [shape: f32[64,24], index: 5, kind: output, shape index: {}]
  %s6 = sld [smem:[#allocation0]]
  $region30: #{tpu_custom_call.1} parent=0
    _
  %s8 = ssub.s32 1, %s6
  %s9 = scalar_select 0, %s8, %s6
  // Predicated region
  $region2: #{tpu_custom_call.1} parent=0 // pred_check
    _
  $region3: #{tpu_custom_call.1} parent=0 // pred_check_branch
    %11 = sbr.rel (0) target = $region5
  $region4: #{tpu_custom_call.1} parent=0 // pred_region
    _
  $region5: #{tpu_custom_call.1} parent=0 // pred_fallthru
    _
  // Predicated region
  $region6: #{tpu_custom_call.1} parent=0 // pred_check
    _
  $region7: #{tpu_custom_call.1} parent=0 // pred_check_branch
    %13 = sbr.rel (0) target = $region9
  $region8: #{tpu_custom_call.1} parent=0 // pred_region
    _
  $region9: #{tpu_custom_call.1} parent=0 // pred_fallthru
    _
  // Predicated region
  $region10: #{tpu_custom_call.1} parent=0 // pred_check
    _
  $region11: #{tpu_custom_call.1} parent=0 // pred_check_branch
    %15 = sbr.rel (0) target = $region13
  $region12: #{tpu_custom_call.1} parent=0 // pred_region
    _
  $region13: #{tpu_custom_call.1} parent=0 // pred_fallthru
    _
  // Predicated region
  $region14: #{tpu_custom_call.1} parent=0 // pred_check
    _
  $region15: #{tpu_custom_call.1} parent=0 // pred_check_branch
    %17 = sbr.rel (0) target = $region17
  $region16: #{tpu_custom_call.1} parent=0 // pred_region
    _
  $region17: #{tpu_custom_call.1} parent=0 // pred_fallthru
    _
  // Predicated region
  $region18: #{tpu_custom_call.1} parent=0 // pred_check
    _
  $region19: #{tpu_custom_call.1} parent=0 // pred_check_branch
    %19 = sbr.rel (0) target = $region21
  $region20: #{tpu_custom_call.1} parent=0 // pred_region
    _
  $region21: #{tpu_custom_call.1} parent=0 // pred_fallthru
    _
  %v20 = vld [vmem:[%s0] sm:$0xff]
  %v21 = vld [vmem:[%s0 + $0x8] sm:$0xff]
  %v22 = vld [vmem:[%s0 + $0x10] sm:$0xff]
  %v23 = vld [vmem:[%s0 + $0x18] sm:$0xff]
  %v24 = vld [vmem:[%s0 + $0x20] sm:$0xff]
  %v25 = vld [vmem:[%s0 + $0x28] sm:$0xff]
  %v26 = vld [vmem:[%s0 + $0x30] sm:$0xff]
  %v27 = vld [vmem:[%s0 + $0x38] sm:$0xff]
  %v28 = vld [vmem:[%s1] sm:$0xff]
  %v29 = vld [vmem:[%s1 + $0x8] sm:$0xff]
  %v30 = vld [vmem:[%s1 + $0x10] sm:$0xff]
  %v31 = vld [vmem:[%s1 + $0x18] sm:$0xff]
  %v32 = vld [vmem:[%s1 + $0x20] sm:$0xff]
  %v33 = vld [vmem:[%s1 + $0x28] sm:$0xff]
  %v34 = vld [vmem:[%s1 + $0x30] sm:$0xff]
  %v35 = vld [vmem:[%s1 + $0x38] sm:$0xff]
  %v36 = vld [vmem:[%s2] sm:$0xff]
  %v37 = vld [vmem:[%s2 + $0x8] sm:$0xff]
  %v38 = vld [vmem:[%s2 + $0x10] sm:$0xff]
  %v39 = vld [vmem:[%s2 + $0x18] sm:$0x1]
  %v40 = vlaneseq
  %v41 = vshrl.u32 %v40, 7
  %v42 = vsub.s32 0, %v41
  %v43 = vrot.slane %v39, %v42
  %vm44 = vcmask 195584
  %v46 = vsel %vm44, %v20, 0
  %v49 = vsel %vm44, %v21, 0
  %v52 = vsel %vm44, %v22, 0
  %v55 = vsel %vm44, %v23, 0
  %v58 = vsel %vm44, %v24, 0
  %v61 = vsel %vm44, %v25, 0
  %v64 = vsel %vm44, %v26, 0
  %v67 = vsel %vm44, %v27, 0
  %69 = vmatprep.subr.mxu0 0.0
  %70 = vmatpush1.msra.mxu0 %v36
  %71 = vmatprep.subr.mxu0 0.0
  %72 = vmatpush1.msra.mxu0 %v37
  %73 = vmatprep.subr.mxu0 0.0
  %74 = vmatpush1.msra.mxu0 %v38
  %75 = vmatprep.subr.mxu0 0.0
  %76 = vmatpush1.msra.mxu0 0.0
  %77 = vmatprep.subr.mxu0 0.0
  %78 = vmatpush1.msra.mxu0 0.0
  %79 = vmatprep.subr.mxu0 0.0
  %80 = vmatpush1.msra.mxu0 0.0
  %81 = vmatprep.subr.mxu0 0.0
  %82 = vmatpush1.msra.mxu0 0.0
  %83 = vmatprep.subr.mxu0 0.0
  %84 = vmatpush1.msra.mxu0 0.0
  %85 = vmatprep.subr.mxu0 0.0
  %86 = vmatpush1.msra.mxu0 0.0
  %87 = vmatprep.subr.mxu0 0.0
  %88 = vmatpush1.msra.mxu0 0.0
  %89 = vmatprep.subr.mxu0 0.0
  %90 = vmatpush1.msra.mxu0 0.0
  %91 = vmatprep.subr.mxu0 0.0
  %92 = vmatpush1.msra.mxu0 0.0
  %93 = vmatprep.subr.mxu0 0.0
  %94 = vmatpush1.msra.mxu0 0.0
  %95 = vmatprep.subr.mxu0 0.0
  %96 = vmatpush1.msra.mxu0 0.0
  %97 = vmatprep.subr.mxu0 0.0
  %98 = vmatpush1.msra.mxu0 0.0
  %99 = vmatprep.subr.mxu0 0.0
  %100 = vmatpush1.msra.mxu0 0.0
  %101 = vmatprep.subr.mxu0 0.0
  %102 = vmatpush1.msra.mxu0 0.0
  %103 = vmatprep.subr.mxu0 0.0
  %104 = vmatpush1.msra.mxu0 0.0
  %105 = vmatprep.subr.mxu0 0.0
  %106 = vmatpush1.msra.mxu0 0.0
  %107 = vmatprep.subr.mxu0 0.0
  %108 = vmatpush1.msra.mxu0 0.0
  %109 = vmatprep.subr.mxu0 0.0
  %110 = vmatpush1.msra.mxu0 0.0
  %111 = vmatprep.subr.mxu0 0.0
  %112 = vmatpush1.msra.mxu0 0.0
  %113 = vmatprep.subr.mxu0 0.0
  %114 = vmatpush1.msra.mxu0 0.0
  %115 = vmatprep.subr.mxu0 0.0
  %116 = vmatpush1.msra.mxu0 0.0
  %117 = vmatprep.subr.mxu0 0.0
  %118 = vmatpush1.msra.mxu0 0.0
  %119 = vmatprep.subr.mxu0 0.0
  %120 = vmatpush1.msra.mxu0 0.0
  %121 = vmatprep.subr.mxu0 0.0
  %122 = vmatpush1.msra.mxu0 0.0
  %123 = vmatprep.subr.mxu0 0.0
  %124 = vmatpush1.msra.mxu0 0.0
  %125 = vmatprep.subr.mxu0 0.0
  %126 = vmatpush1.msra.mxu0 0.0
  %127 = vmatprep.subr.mxu0 0.0
  %128 = vmatpush1.msra.mxu0 0.0
  %129 = vmatprep.subr.mxu0 0.0
  %130 = vmatpush1.msra.mxu0 0.0
  %131 = vmatprep.subr.mxu0 0.0
  %132 = vmatpush1.msra.mxu0 0.0
  %133 = vmatprep.mubr.f32.mxu0 0.0
  %134 = vmatmul.mubr.f32.gmra.mrb[0].mxu0 %v46
  %v135 = vpop.f32.mrb[0].mxu0
  %v136 = vadd.f32 %v43, %v135
  %v137 = vpop.f32.mrb[0].mxu0
  %138 = vmatprep.mubr.f32.mxu0 0.0
  %139 = vmatmul.mubr.f32.gmra.mrb[0].mxu0 %v49
  %v140 = vpop.f32.mrb[0].mxu0
  %v141 = vadd.f32 %v43, %v140
  %v142 = vpop.f32.mrb[0].mxu0
  %143 = vmatprep.mubr.f32.mxu0 0.0
  %144 = vmatmul.mubr.f32.gmra.mrb[0].mxu0 %v52
  %v145 = vpop.f32.mrb[0].mxu0
  %v146 = vadd.f32 %v43, %v145
  %v147 = vpop.f32.mrb[0].mxu0
  %148 = vmatprep.mubr.f32.mxu0 0.0
  %149 = vmatmul.mubr.f32.gmra.mrb[0].mxu0 %v55
  %v150 = vpop.f32.mrb[0].mxu0
  %v151 = vadd.f32 %v43, %v150
  %v152 = vpop.f32.mrb[0].mxu0
  %153 = vmatprep.mubr.f32.mxu0 0.0
  %154 = vmatmul.mubr.f32.gmra.mrb[0].mxu0 %v58
  %v155 = vpop.f32.mrb[0].mxu0
  %v156 = vadd.f32 %v43, %v155
  %v157 = vpop.f32.mrb[0].mxu0
  %158 = vmatprep.mubr.f32.mxu0 0.0
  %159 = vmatmul.mubr.f32.gmra.mrb[0].mxu0 %v61
  %v160 = vpop.f32.mrb[0].mxu0
  %v161 = vadd.f32 %v43, %v160
  %v162 = vpop.f32.mrb[0].mxu0
  %163 = vmatprep.mubr.f32.mxu0 0.0
  %164 = vmatmul.mubr.f32.gmra.mrb[0].mxu0 %v64
  %v165 = vpop.f32.mrb[0].mxu0
  %v166 = vadd.f32 %v43, %v165
  %v167 = vpop.f32.mrb[0].mxu0
  %168 = vmatprep.mubr.f32.mxu0 0.0
  %169 = vmatmul.mubr.f32.gmra.mrb[0].mxu0 %v67
  %v170 = vpop.f32.mrb[0].mxu0
  %v171 = vadd.f32 %v43, %v170
  %v172 = vpop.f32.mrb[0].mxu0
  %173 = vdwg.mxu0
  %v174 = vmax.f32 %v136, 0.0
  %v175 = vmax.f32 %v141, 0.0
  %v176 = vmax.f32 %v146, 0.0
  %v177 = vmax.f32 %v151, 0.0
  %v178 = vmax.f32 %v156, 0.0
  %v179 = vmax.f32 %v161, 0.0
  %v180 = vmax.f32 %v166, 0.0
  %v181 = vmax.f32 %v171, 0.0
  %v182 = vld [vmem:[%s3] sm:$0xff]
  %v183 = vld [vmem:[%s3 + $0x8] sm:$0xff]
  %v184 = vld [vmem:[%s3 + $0x10] sm:$0xff]
  %v185 = vld [vmem:[%s3 + $0x18] sm:$0xff]
  %v186 = vld [vmem:[%s3 + $0x20] sm:$0x1]
  %v187 = vlaneseq
  %v188 = vshrl.u32 %v187, 7
  %v189 = vsub.s32 0, %v188
  %v190 = vrot.slane %v186, %v189
  %vm191 = vcmask 261120
  %v193 = vsel %vm191, %v174, 0
  %v196 = vsel %vm191, %v175, 0
  %v199 = vsel %vm191, %v176, 0
  %v202 = vsel %vm191, %v177, 0
  %v205 = vsel %vm191, %v178, 0
  %v208 = vsel %vm191, %v179, 0
  %v211 = vsel %vm191, %v180, 0
  %v214 = vsel %vm191, %v181, 0
  %216 = vmatprep.subr.mxu0 0.0
  %217 = vmatpush1.msra.mxu0 %v182
  %218 = vmatprep.subr.mxu0 0.0
  %219 = vmatpush1.msra.mxu0 %v183
  %220 = vmatprep.subr.mxu0 0.0
  %221 = vmatpush1.msra.mxu0 %v184
  %222 = vmatprep.subr.mxu0 0.0
  %223 = vmatpush1.msra.mxu0 %v185
  %224 = vmatprep.subr.mxu0 0.0
  %225 = vmatpush1.msra.mxu0 0.0
  %226 = vmatprep.subr.mxu0 0.0
  %227 = vmatpush1.msra.mxu0 0.0
  %228 = vmatprep.subr.mxu0 0.0
  %229 = vmatpush1.msra.mxu0 0.0
  %230 = vmatprep.subr.mxu0 0.0
  %231 = vmatpush1.msra.mxu0 0.0
  %232 = vmatprep.subr.mxu0 0.0
  %233 = vmatpush1.msra.mxu0 0.0
  %234 = vmatprep.subr.mxu0 0.0
  %235 = vmatpush1.msra.mxu0 0.0
  %236 = vmatprep.subr.mxu0 0.0
  %237 = vmatpush1.msra.mxu0 0.0
  %238 = vmatprep.subr.mxu0 0.0
  %239 = vmatpush1.msra.mxu0 0.0
  %240 = vmatprep.subr.mxu0 0.0
  %241 = vmatpush1.msra.mxu0 0.0
  %242 = vmatprep.subr.mxu0 0.0
  %243 = vmatpush1.msra.mxu0 0.0
  %244 = vmatprep.subr.mxu0 0.0
  %245 = vmatpush1.msra.mxu0 0.0
  %246 = vmatprep.subr.mxu0 0.0
  %247 = vmatpush1.msra.mxu0 0.0
  %248 = vmatprep.subr.mxu0 0.0
  %249 = vmatpush1.msra.mxu0 0.0
  %250 = vmatprep.subr.mxu0 0.0
  %251 = vmatpush1.msra.mxu0 0.0
  %252 = vmatprep.subr.mxu0 0.0
  %253 = vmatpush1.msra.mxu0 0.0
  %254 = vmatprep.subr.mxu0 0.0
  %255 = vmatpush1.msra.mxu0 0.0
  %256 = vmatprep.subr.mxu0 0.0
  %257 = vmatpush1.msra.mxu0 0.0
  %258 = vmatprep.subr.mxu0 0.0
  %259 = vmatpush1.msra.mxu0 0.0
  %260 = vmatprep.subr.mxu0 0.0
  %261 = vmatpush1.msra.mxu0 0.0
  %262 = vmatprep.subr.mxu0 0.0
  %263 = vmatpush1.msra.mxu0 0.0
  %264 = vmatprep.subr.mxu0 0.0
  %265 = vmatpush1.msra.mxu0 0.0
  %266 = vmatprep.subr.mxu0 0.0
  %267 = vmatpush1.msra.mxu0 0.0
  %268 = vmatprep.subr.mxu0 0.0
  %269 = vmatpush1.msra.mxu0 0.0
  %270 = vmatprep.subr.mxu0 0.0
  %271 = vmatpush1.msra.mxu0 0.0
  %272 = vmatprep.subr.mxu0 0.0
  %273 = vmatpush1.msra.mxu0 0.0
  %274 = vmatprep.subr.mxu0 0.0
  %275 = vmatpush1.msra.mxu0 0.0
  %276 = vmatprep.subr.mxu0 0.0
  %277 = vmatpush1.msra.mxu0 0.0
  %278 = vmatprep.subr.mxu0 0.0
  %279 = vmatpush1.msra.mxu0 0.0
  %280 = vmatprep.mubr.f32.mxu0 0.0
  %281 = vmatmul.mubr.f32.gmra.mrb[0].mxu0 %v193
  %v282 = vpop.f32.mrb[0].mxu0
  %v283 = vadd.f32 %v190, %v282
  %v284 = vpop.f32.mrb[0].mxu0
  %285 = vmatprep.mubr.f32.mxu0 0.0
  %286 = vmatmul.mubr.f32.gmra.mrb[0].mxu0 %v196
  %v287 = vpop.f32.mrb[0].mxu0
  %v288 = vadd.f32 %v190, %v287
  %v289 = vpop.f32.mrb[0].mxu0
  %290 = vmatprep.mubr.f32.mxu0 0.0
  %291 = vmatmul.mubr.f32.gmra.mrb[0].mxu0 %v199
  %v292 = vpop.f32.mrb[0].mxu0
  %v293 = vadd.f32 %v190, %v292
  %v294 = vpop.f32.mrb[0].mxu0
  %295 = vmatprep.mubr.f32.mxu0 0.0
  %296 = vmatmul.mubr.f32.gmra.mrb[0].mxu0 %v202
  %v297 = vpop.f32.mrb[0].mxu0
  %v298 = vadd.f32 %v190, %v297
  %v299 = vpop.f32.mrb[0].mxu0
  %300 = vmatprep.mubr.f32.mxu0 0.0
  %301 = vmatmul.mubr.f32.gmra.mrb[0].mxu0 %v205
  %v302 = vpop.f32.mrb[0].mxu0
  %v303 = vadd.f32 %v190, %v302
  %v304 = vpop.f32.mrb[0].mxu0
  %305 = vmatprep.mubr.f32.mxu0 0.0
  %306 = vmatmul.mubr.f32.gmra.mrb[0].mxu0 %v208
  %v307 = vpop.f32.mrb[0].mxu0
  %v308 = vadd.f32 %v190, %v307
  %v309 = vpop.f32.mrb[0].mxu0
  %310 = vmatprep.mubr.f32.mxu0 0.0
  %311 = vmatmul.mubr.f32.gmra.mrb[0].mxu0 %v211
  %v312 = vpop.f32.mrb[0].mxu0
  %v313 = vadd.f32 %v190, %v312
  %v314 = vpop.f32.mrb[0].mxu0
  %315 = vmatprep.mubr.f32.mxu0 0.0
  %316 = vmatmul.mubr.f32.gmra.mrb[0].mxu0 %v214
  %v317 = vpop.f32.mrb[0].mxu0
  %v318 = vadd.f32 %v190, %v317
  %v319 = vpop.f32.mrb[0].mxu0
  %320 = vdwg.mxu0
  %v321 = vmul.f32 %v283, 0.5
  %v322 = vmul.f32 %v288, 0.5
  %v323 = vmul.f32 %v293, 0.5
  %v324 = vmul.f32 %v298, 0.5
  %v325 = vmul.f32 %v303, 0.5
  %v326 = vmul.f32 %v308, 0.5
  %v327 = vmul.f32 %v313, 0.5
  %v328 = vmul.f32 %v318, 0.5
  %v329 = vmul.f32 %v321, 1.442695
  %v330 = vpow.pop %v329
  %v331 = vmul.f32 %v322, 1.442695
  %v332 = vpow.pop %v331
  %v333 = vmul.f32 %v323, 1.442695
  %v334 = vpow.pop %v333
  %v335 = vmul.f32 %v324, 1.442695
  %v336 = vpow.pop %v335
  %v337 = vmul.f32 %v325, 1.442695
  %v338 = vpow.pop %v337
  %v339 = vmul.f32 %v326, 1.442695
  %v340 = vpow.pop %v339
  %v341 = vmul.f32 %v327, 1.442695
  %v342 = vpow.pop %v341
  %v343 = vmul.f32 %v328, 1.442695
  %v344 = vpow.pop %v343
  %353 = vrot.lane.b32.xlu0 %v330, 120
  %v354 = vpop.permute.xlu0 %353
  %355 = vrot.lane.b32.xlu0 %v332, 120
  %v356 = vpop.permute.xlu0 %355
  %357 = vrot.lane.b32.xlu0 %v334, 120
  %v358 = vpop.permute.xlu0 %357
  %359 = vrot.lane.b32.xlu0 %v336, 120
  %v360 = vpop.permute.xlu0 %359
  %361 = vrot.lane.b32.xlu0 %v338, 120
  %v362 = vpop.permute.xlu0 %361
  %363 = vrot.lane.b32.xlu0 %v340, 120
  %v364 = vpop.permute.xlu0 %363
  %365 = vrot.lane.b32.xlu0 %v342, 120
  %v366 = vpop.permute.xlu0 %365
  %367 = vrot.lane.b32.xlu0 %v344, 120
  %v368 = vpop.permute.xlu0 %367
  %v377 = vmul.f32 %v28, %v354
  %v378 = vmul.f32 %v29, %v356
  %v379 = vmul.f32 %v30, %v358
  %v380 = vmul.f32 %v31, %v360
  %v381 = vmul.f32 %v32, %v362
  %v382 = vmul.f32 %v33, %v364
  %v383 = vmul.f32 %v34, %v366
  %v384 = vmul.f32 %v35, %v368
  %v385 = vadd.f32 %v283, %v377
  %v386 = vadd.f32 %v288, %v378
  %v387 = vadd.f32 %v293, %v379
  %v388 = vadd.f32 %v298, %v380
  %v389 = vadd.f32 %v303, %v381
  %v390 = vadd.f32 %v308, %v382
  %v391 = vadd.f32 %v313, %v383
  %v392 = vadd.f32 %v318, %v384
  %v393 = vld [vmem:[%s2 + $0x20] sm:$0xff]
  %v394 = vld [vmem:[%s2 + $0x28] sm:$0xff]
  %v395 = vld [vmem:[%s2 + $0x30] sm:$0xff]
  %v396 = vld [vmem:[%s2 + $0x38] sm:$0xff]
  %v397 = vld [vmem:[%s2 + $0x40] sm:$0x1]
  %vm398 = vcmask 64512
  %v400 = vsel %vm398, %v385, 0
  %v403 = vsel %vm398, %v386, 0
  %v406 = vsel %vm398, %v387, 0
  %v409 = vsel %vm398, %v388, 0
  %v412 = vsel %vm398, %v389, 0
  %v415 = vsel %vm398, %v390, 0
  %v418 = vsel %vm398, %v391, 0
  %v421 = vsel %vm398, %v392, 0
  %423 = vmatprep.subr.mxu0 0.0
  %424 = vmatpush1.msra.mxu0 %v396
  %425 = vmatprep.subr.mxu0 0.0
  %426 = vmatpush1.msra.mxu0 0.0
  %427 = vmatprep.subr.mxu0 0.0
  %428 = vmatpush1.msra.mxu0 0.0
  %429 = vmatprep.subr.mxu0 0.0
  %430 = vmatpush1.msra.mxu0 0.0
  %431 = vmatprep.subr.mxu0 0.0
  %432 = vmatpush1.msra.mxu0 0.0
  %433 = vmatprep.subr.mxu0 0.0
  %434 = vmatpush1.msra.mxu0 0.0
  %435 = vmatprep.subr.mxu0 0.0
  %436 = vmatpush1.msra.mxu0 0.0
  %437 = vmatprep.subr.mxu0 0.0
  %438 = vmatpush1.msra.mxu0 0.0
  %439 = vmatprep.subr.mxu0 0.0
  %440 = vmatpush1.msra.mxu0 0.0
  %441 = vmatprep.subr.mxu0 0.0
  %442 = vmatpush1.msra.mxu0 0.0
  %443 = vmatprep.subr.mxu0 0.0
  %444 = vmatpush1.msra.mxu0 0.0
  %445 = vmatprep.subr.mxu0 0.0
  %446 = vmatpush1.msra.mxu0 0.0
  %447 = vmatprep.subr.mxu0 0.0
  %448 = vmatpush1.msra.mxu0 0.0
  %449 = vmatprep.subr.mxu0 0.0
  %450 = vmatpush1.msra.mxu0 0.0
  %451 = vmatprep.subr.mxu0 0.0
  %452 = vmatpush1.msra.mxu0 0.0
  %453 = vmatprep.subr.mxu0 0.0
  %454 = vmatpush1.msra.mxu0 0.0
  %455 = vmatprep.subr.mxu0 0.0
  %456 = vmatpush1.msra.mxu0 0.0
  %457 = vmatprep.subr.mxu0 0.0
  %458 = vmatpush1.msra.mxu0 0.0
  %459 = vmatprep.subr.mxu0 0.0
  %460 = vmatpush1.msra.mxu0 0.0
  %461 = vmatprep.subr.mxu0 0.0
  %462 = vmatpush1.msra.mxu0 0.0
  %463 = vmatprep.subr.mxu0 0.0
  %464 = vmatpush1.msra.mxu0 0.0
  %465 = vmatprep.subr.mxu0 0.0
  %466 = vmatpush1.msra.mxu0 0.0
  %467 = vmatprep.subr.mxu0 0.0
  %468 = vmatpush1.msra.mxu0 0.0
  %469 = vmatprep.subr.mxu0 0.0
  %470 = vmatpush1.msra.mxu0 0.0
  %471 = vmatprep.subr.mxu0 0.0
  %472 = vmatpush1.msra.mxu0 0.0
  %473 = vmatprep.subr.mxu0 0.0
  %474 = vmatpush1.msra.mxu0 0.0
  %475 = vmatprep.subr.mxu0 0.0
  %476 = vmatpush1.msra.mxu0 0.0
  %477 = vmatprep.subr.mxu0 0.0
  %478 = vmatpush1.msra.mxu0 0.0
  %479 = vmatprep.subr.mxu0 0.0
  %480 = vmatpush1.msra.mxu0 0.0
  %481 = vmatprep.subr.mxu0 0.0
  %482 = vmatpush1.msra.mxu0 0.0
  %483 = vmatprep.subr.mxu0 0.0
  %484 = vmatpush1.msra.mxu0 0.0
  %485 = vmatprep.subr.mxu0 0.0
  %486 = vmatpush1.msra.mxu0 0.0
  %487 = vmatprep.mubr.f32.mxu0 0.0
  %488 = vmatmul.mubr.f32.gmra.mrb[0].mxu0 %v400
  %v489 = vpop.f32.mrb[0].mxu0
  %v490 = vadd.f32 0.0, %v489
  %v491 = vpop.f32.mrb[0].mxu0
  %492 = vmatprep.mubr.f32.mxu0 0.0
  %493 = vmatmul.mubr.f32.gmra.mrb[0].mxu0 %v403
  %v494 = vpop.f32.mrb[0].mxu0
  %v495 = vadd.f32 0.0, %v494
  %v496 = vpop.f32.mrb[0].mxu0
  %497 = vmatprep.mubr.f32.mxu0 0.0
  %498 = vmatmul.mubr.f32.gmra.mrb[0].mxu0 %v406
  %v499 = vpop.f32.mrb[0].mxu0
  %v500 = vadd.f32 0.0, %v499
  %v501 = vpop.f32.mrb[0].mxu0
  %502 = vmatprep.mubr.f32.mxu0 0.0
  %503 = vmatmul.mubr.f32.gmra.mrb[0].mxu0 %v409
  %v504 = vpop.f32.mrb[0].mxu0
  %v505 = vadd.f32 0.0, %v504
  %v506 = vpop.f32.mrb[0].mxu0
  %507 = vmatprep.mubr.f32.mxu0 0.0
  %508 = vmatmul.mubr.f32.gmra.mrb[0].mxu0 %v412
  %v509 = vpop.f32.mrb[0].mxu0
  %v510 = vadd.f32 0.0, %v509
  %v511 = vpop.f32.mrb[0].mxu0
  %512 = vmatprep.mubr.f32.mxu0 0.0
  %513 = vmatmul.mubr.f32.gmra.mrb[0].mxu0 %v415
  %v514 = vpop.f32.mrb[0].mxu0
  %v515 = vadd.f32 0.0, %v514
  %v516 = vpop.f32.mrb[0].mxu0
  %517 = vmatprep.mubr.f32.mxu0 0.0
  %518 = vmatmul.mubr.f32.gmra.mrb[0].mxu0 %v418
  %v519 = vpop.f32.mrb[0].mxu0
  %v520 = vadd.f32 0.0, %v519
  %v521 = vpop.f32.mrb[0].mxu0
  %522 = vmatprep.mubr.f32.mxu0 0.0
  %523 = vmatmul.mubr.f32.gmra.mrb[0].mxu0 %v421
  %v524 = vpop.f32.mrb[0].mxu0
  %v525 = vadd.f32 0.0, %v524
  %v526 = vpop.f32.mrb[0].mxu0
  %527 = vdwg.mxu0
  %528 = vmatprep.subr.mxu0 0.0
  %529 = vmatpush1.msra.mxu0 %v393
  %530 = vmatprep.subr.mxu0 0.0
  %531 = vmatpush1.msra.mxu0 %v394
  %532 = vmatprep.subr.mxu0 0.0
  %533 = vmatpush1.msra.mxu0 %v395
  %534 = vmatprep.subr.mxu0 0.0
  %535 = vmatpush1.msra.mxu0 0.0
  %536 = vmatprep.subr.mxu0 0.0
  %537 = vmatpush1.msra.mxu0 0.0
  %538 = vmatprep.subr.mxu0 0.0
  %539 = vmatpush1.msra.mxu0 0.0
  %540 = vmatprep.subr.mxu0 0.0
  %541 = vmatpush1.msra.mxu0 0.0
  %542 = vmatprep.subr.mxu0 0.0
  %543 = vmatpush1.msra.mxu0 0.0
  %544 = vmatprep.subr.mxu0 0.0
  %545 = vmatpush1.msra.mxu0 0.0
  %546 = vmatprep.subr.mxu0 0.0
  %547 = vmatpush1.msra.mxu0 0.0
  %548 = vmatprep.subr.mxu0 0.0
  %549 = vmatpush1.msra.mxu0 0.0
  %550 = vmatprep.subr.mxu0 0.0
  %551 = vmatpush1.msra.mxu0 0.0
  %552 = vmatprep.subr.mxu0 0.0
  %553 = vmatpush1.msra.mxu0 0.0
  %554 = vmatprep.subr.mxu0 0.0
  %555 = vmatpush1.msra.mxu0 0.0
  %556 = vmatprep.subr.mxu0 0.0
  %557 = vmatpush1.msra.mxu0 0.0
  %558 = vmatprep.subr.mxu0 0.0
  %559 = vmatpush1.msra.mxu0 0.0
  %560 = vmatprep.subr.mxu0 0.0
  %561 = vmatpush1.msra.mxu0 0.0
  %562 = vmatprep.subr.mxu0 0.0
  %563 = vmatpush1.msra.mxu0 0.0
  %564 = vmatprep.subr.mxu0 0.0
  %565 = vmatpush1.msra.mxu0 0.0
  %566 = vmatprep.subr.mxu0 0.0
  %567 = vmatpush1.msra.mxu0 0.0
  %568 = vmatprep.subr.mxu0 0.0
  %569 = vmatpush1.msra.mxu0 0.0
  %570 = vmatprep.subr.mxu0 0.0
  %571 = vmatpush1.msra.mxu0 0.0
  %572 = vmatprep.subr.mxu0 0.0
  %573 = vmatpush1.msra.mxu0 0.0
  %574 = vmatprep.subr.mxu0 0.0
  %575 = vmatpush1.msra.mxu0 0.0
  %576 = vmatprep.subr.mxu0 0.0
  %577 = vmatpush1.msra.mxu0 0.0
  %578 = vmatprep.subr.mxu0 0.0
  %579 = vmatpush1.msra.mxu0 0.0
  %580 = vmatprep.subr.mxu0 0.0
  %581 = vmatpush1.msra.mxu0 0.0
  %582 = vmatprep.subr.mxu0 0.0
  %583 = vmatpush1.msra.mxu0 0.0
  %584 = vmatprep.subr.mxu0 0.0
  %585 = vmatpush1.msra.mxu0 0.0
  %586 = vmatprep.subr.mxu0 0.0
  %587 = vmatpush1.msra.mxu0 0.0
  %588 = vmatprep.subr.mxu0 0.0
  %589 = vmatpush1.msra.mxu0 0.0
  %590 = vmatprep.subr.mxu0 0.0
  %591 = vmatpush1.msra.mxu0 0.0
  %592 = vmatprep.mubr.f32.mxu0 0.0
  %593 = vmatmul.mubr.f32.gmra.mrb[0].mxu0 %v46
  %v594 = vpop.f32.mrb[0].mxu0
  %v595 = vadd.f32 %v490, %v594
  %v596 = vpop.f32.mrb[0].mxu0
  %597 = vmatprep.mubr.f32.mxu0 0.0
  %598 = vmatmul.mubr.f32.gmra.mrb[0].mxu0 %v49
  %v599 = vpop.f32.mrb[0].mxu0
  %v600 = vadd.f32 %v495, %v599
  %v601 = vpop.f32.mrb[0].mxu0
  %602 = vmatprep.mubr.f32.mxu0 0.0
  %603 = vmatmul.mubr.f32.gmra.mrb[0].mxu0 %v52
  %v604 = vpop.f32.mrb[0].mxu0
  %v605 = vadd.f32 %v500, %v604
  %v606 = vpop.f32.mrb[0].mxu0
  %607 = vmatprep.mubr.f32.mxu0 0.0
  %608 = vmatmul.mubr.f32.gmra.mrb[0].mxu0 %v55
  %v609 = vpop.f32.mrb[0].mxu0
  %v610 = vadd.f32 %v505, %v609
  %v611 = vpop.f32.mrb[0].mxu0
  %612 = vmatprep.mubr.f32.mxu0 0.0
  %613 = vmatmul.mubr.f32.gmra.mrb[0].mxu0 %v58
  %v614 = vpop.f32.mrb[0].mxu0
  %v615 = vadd.f32 %v510, %v614
  %v616 = vpop.f32.mrb[0].mxu0
  %617 = vmatprep.mubr.f32.mxu0 0.0
  %618 = vmatmul.mubr.f32.gmra.mrb[0].mxu0 %v61
  %v619 = vpop.f32.mrb[0].mxu0
  %v620 = vadd.f32 %v515, %v619
  %v621 = vpop.f32.mrb[0].mxu0
  %622 = vmatprep.mubr.f32.mxu0 0.0
  %623 = vmatmul.mubr.f32.gmra.mrb[0].mxu0 %v64
  %v624 = vpop.f32.mrb[0].mxu0
  %v625 = vadd.f32 %v520, %v624
  %v626 = vpop.f32.mrb[0].mxu0
  %627 = vmatprep.mubr.f32.mxu0 0.0
  %628 = vmatmul.mubr.f32.gmra.mrb[0].mxu0 %v67
  %v629 = vpop.f32.mrb[0].mxu0
  %v630 = vadd.f32 %v525, %v629
  %v631 = vpop.f32.mrb[0].mxu0
  %632 = vdwg.mxu0
  %v633 = vlaneseq
  %v634 = vshrl.u32 %v633, 7
  %v635 = vsub.s32 0, %v634
  %v636 = vrot.slane %v397, %v635
  %v637 = vadd.f32 %v595, %v636
  %v638 = vadd.f32 %v600, %v636
  %v639 = vadd.f32 %v605, %v636
  %v640 = vadd.f32 %v610, %v636
  %v641 = vadd.f32 %v615, %v636
  %v642 = vadd.f32 %v620, %v636
  %v643 = vadd.f32 %v625, %v636
  %v644 = vadd.f32 %v630, %v636
  %v645 = vmax.f32 %v637, 0.0
  %v646 = vmax.f32 %v638, 0.0
  %v647 = vmax.f32 %v639, 0.0
  %v648 = vmax.f32 %v640, 0.0
  %v649 = vmax.f32 %v641, 0.0
  %v650 = vmax.f32 %v642, 0.0
  %v651 = vmax.f32 %v643, 0.0
  %v652 = vmax.f32 %v644, 0.0
  %v653 = vld [vmem:[%s4] sm:$0xff]
  %v654 = vld [vmem:[%s4 + $0x8] sm:$0xff]
  %v655 = vld [vmem:[%s4 + $0x10] sm:$0xff]
  %v656 = vld [vmem:[%s4 + $0x18] sm:$0xff]
  %v657 = vld [vmem:[%s4 + $0x20] sm:$0x1]
  %v658 = vlaneseq
  %v659 = vshrl.u32 %v658, 7
  %v660 = vsub.s32 0, %v659
  %v661 = vrot.slane %v657, %v660
  %v663 = vsel %vm191, %v645, 0
  %v666 = vsel %vm191, %v646, 0
  %v669 = vsel %vm191, %v647, 0
  %v672 = vsel %vm191, %v648, 0
  %v675 = vsel %vm191, %v649, 0
  %v678 = vsel %vm191, %v650, 0
  %v681 = vsel %vm191, %v651, 0
  %v684 = vsel %vm191, %v652, 0
  %686 = vmatprep.subr.mxu0 0.0
  %687 = vmatpush1.msra.mxu0 %v653
  %688 = vmatprep.subr.mxu0 0.0
  %689 = vmatpush1.msra.mxu0 %v654
  %690 = vmatprep.subr.mxu0 0.0
  %691 = vmatpush1.msra.mxu0 %v655
  %692 = vmatprep.subr.mxu0 0.0
  %693 = vmatpush1.msra.mxu0 %v656
  %694 = vmatprep.subr.mxu0 0.0
  %695 = vmatpush1.msra.mxu0 0.0
  %696 = vmatprep.subr.mxu0 0.0
  %697 = vmatpush1.msra.mxu0 0.0
  %698 = vmatprep.subr.mxu0 0.0
  %699 = vmatpush1.msra.mxu0 0.0
  %700 = vmatprep.subr.mxu0 0.0
  %701 = vmatpush1.msra.mxu0 0.0
  %702 = vmatprep.subr.mxu0 0.0
  %703 = vmatpush1.msra.mxu0 0.0
  %704 = vmatprep.subr.mxu0 0.0
  %705 = vmatpush1.msra.mxu0 0.0
  %706 = vmatprep.subr.mxu0 0.0
  %707 = vmatpush1.msra.mxu0 0.0
  %708 = vmatprep.subr.mxu0 0.0
  %709 = vmatpush1.msra.mxu0 0.0
  %710 = vmatprep.subr.mxu0 0.0
  %711 = vmatpush1.msra.mxu0 0.0
  %712 = vmatprep.subr.mxu0 0.0
  %713 = vmatpush1.msra.mxu0 0.0
  %714 = vmatprep.subr.mxu0 0.0
  %715 = vmatpush1.msra.mxu0 0.0
  %716 = vmatprep.subr.mxu0 0.0
  %717 = vmatpush1.msra.mxu0 0.0
  %718 = vmatprep.subr.mxu0 0.0
  %719 = vmatpush1.msra.mxu0 0.0
  %720 = vmatprep.subr.mxu0 0.0
  %721 = vmatpush1.msra.mxu0 0.0
  %722 = vmatprep.subr.mxu0 0.0
  %723 = vmatpush1.msra.mxu0 0.0
  %724 = vmatprep.subr.mxu0 0.0
  %725 = vmatpush1.msra.mxu0 0.0
  %726 = vmatprep.subr.mxu0 0.0
  %727 = vmatpush1.msra.mxu0 0.0
  %728 = vmatprep.subr.mxu0 0.0
  %729 = vmatpush1.msra.mxu0 0.0
  %730 = vmatprep.subr.mxu0 0.0
  %731 = vmatpush1.msra.mxu0 0.0
  %732 = vmatprep.subr.mxu0 0.0
  %733 = vmatpush1.msra.mxu0 0.0
  %734 = vmatprep.subr.mxu0 0.0
  %735 = vmatpush1.msra.mxu0 0.0
  %736 = vmatprep.subr.mxu0 0.0
  %737 = vmatpush1.msra.mxu0 0.0
  %738 = vmatprep.subr.mxu0 0.0
  %739 = vmatpush1.msra.mxu0 0.0
  %740 = vmatprep.subr.mxu0 0.0
  %741 = vmatpush1.msra.mxu0 0.0
  %742 = vmatprep.subr.mxu0 0.0
  %743 = vmatpush1.msra.mxu0 0.0
  %744 = vmatprep.subr.mxu0 0.0
  %745 = vmatpush1.msra.mxu0 0.0
  %746 = vmatprep.subr.mxu0 0.0
  %747 = vmatpush1.msra.mxu0 0.0
  %748 = vmatprep.subr.mxu0 0.0
  %749 = vmatpush1.msra.mxu0 0.0
  %750 = vmatprep.mubr.f32.mxu0 0.0
  %751 = vmatmul.mubr.f32.gmra.mrb[0].mxu0 %v663
  %v752 = vpop.f32.mrb[0].mxu0
  %v753 = vadd.f32 %v661, %v752
  %v754 = vpop.f32.mrb[0].mxu0
  %755 = vmatprep.mubr.f32.mxu0 0.0
  %756 = vmatmul.mubr.f32.gmra.mrb[0].mxu0 %v666
  %v757 = vpop.f32.mrb[0].mxu0
  %v758 = vadd.f32 %v661, %v757
  %v759 = vpop.f32.mrb[0].mxu0
  %760 = vmatprep.mubr.f32.mxu0 0.0
  %761 = vmatmul.mubr.f32.gmra.mrb[0].mxu0 %v669
  %v762 = vpop.f32.mrb[0].mxu0
  %v763 = vadd.f32 %v661, %v762
  %v764 = vpop.f32.mrb[0].mxu0
  %765 = vmatprep.mubr.f32.mxu0 0.0
  %766 = vmatmul.mubr.f32.gmra.mrb[0].mxu0 %v672
  %v767 = vpop.f32.mrb[0].mxu0
  %v768 = vadd.f32 %v661, %v767
  %v769 = vpop.f32.mrb[0].mxu0
  %770 = vmatprep.mubr.f32.mxu0 0.0
  %771 = vmatmul.mubr.f32.gmra.mrb[0].mxu0 %v675
  %v772 = vpop.f32.mrb[0].mxu0
  %v773 = vadd.f32 %v661, %v772
  %v774 = vpop.f32.mrb[0].mxu0
  %775 = vmatprep.mubr.f32.mxu0 0.0
  %776 = vmatmul.mubr.f32.gmra.mrb[0].mxu0 %v678
  %v777 = vpop.f32.mrb[0].mxu0
  %v778 = vadd.f32 %v661, %v777
  %v779 = vpop.f32.mrb[0].mxu0
  %780 = vmatprep.mubr.f32.mxu0 0.0
  %781 = vmatmul.mubr.f32.gmra.mrb[0].mxu0 %v681
  %v782 = vpop.f32.mrb[0].mxu0
  %v783 = vadd.f32 %v661, %v782
  %v784 = vpop.f32.mrb[0].mxu0
  %785 = vmatprep.mubr.f32.mxu0 0.0
  %786 = vmatmul.mubr.f32.gmra.mrb[0].mxu0 %v684
  %v787 = vpop.f32.mrb[0].mxu0
  %v788 = vadd.f32 %v661, %v787
  %v789 = vpop.f32.mrb[0].mxu0
  %790 = vdwg.mxu0
  %vm791 = vcmask 130048
  %792 = vst.msk [vmem:[%s5] sm:$0xff] %vm791, %v283
  %793 = vst.msk [vmem:[%s5 + $0x8] sm:$0xff] %vm791, %v288
  %794 = vst.msk [vmem:[%s5 + $0x10] sm:$0xff] %vm791, %v293
  %795 = vst.msk [vmem:[%s5 + $0x18] sm:$0xff] %vm791, %v298
  %796 = vst.msk [vmem:[%s5 + $0x20] sm:$0xff] %vm791, %v303
  %797 = vst.msk [vmem:[%s5 + $0x28] sm:$0xff] %vm791, %v308
  %798 = vst.msk [vmem:[%s5 + $0x30] sm:$0xff] %vm791, %v313
  %799 = vst.msk [vmem:[%s5 + $0x38] sm:$0xff] %vm791, %v318
  %808 = vrot.lane.b32.xlu0 %v753, 16
  %v809 = vpop.permute.xlu0 %808
  %810 = vrot.lane.b32.xlu0 %v758, 16
  %v811 = vpop.permute.xlu0 %810
  %812 = vrot.lane.b32.xlu0 %v763, 16
  %v813 = vpop.permute.xlu0 %812
  %814 = vrot.lane.b32.xlu0 %v768, 16
  %v815 = vpop.permute.xlu0 %814
  %816 = vrot.lane.b32.xlu0 %v773, 16
  %v817 = vpop.permute.xlu0 %816
  %818 = vrot.lane.b32.xlu0 %v778, 16
  %v819 = vpop.permute.xlu0 %818
  %820 = vrot.lane.b32.xlu0 %v783, 16
  %v821 = vpop.permute.xlu0 %820
  %822 = vrot.lane.b32.xlu0 %v788, 16
  %v823 = vpop.permute.xlu0 %822
  %vm832 = vcmask 195712
  %833 = vst.msk [vmem:[%s5] sm:$0xff] %vm832, %v809
  %834 = vst.msk [vmem:[%s5 + $0x8] sm:$0xff] %vm832, %v811
  %835 = vst.msk [vmem:[%s5 + $0x10] sm:$0xff] %vm832, %v813
  %836 = vst.msk [vmem:[%s5 + $0x18] sm:$0xff] %vm832, %v815
  %837 = vst.msk [vmem:[%s5 + $0x20] sm:$0xff] %vm832, %v817
  %838 = vst.msk [vmem:[%s5 + $0x28] sm:$0xff] %vm832, %v819
  %839 = vst.msk [vmem:[%s5 + $0x30] sm:$0xff] %vm832, %v821
  %840 = vst.msk [vmem:[%s5 + $0x38] sm:$0xff] %vm832, %v823
  // Predicated region
  $region22: #{tpu_custom_call.1} parent=0 // pred_check
    _
  $region23: #{tpu_custom_call.1} parent=0 // pred_check_branch
    %842 = sbr.rel (0) target = $region25
  $region24: #{tpu_custom_call.1} parent=0 // pred_region
    _
  $region25: #{tpu_custom_call.1} parent=0 // pred_fallthru
    _
  // Predicated region
  $region26: #{tpu_custom_call.1} parent=0 // pred_check
    _
  $region27: #{tpu_custom_call.1} parent=0 // pred_check_branch
    %844 = sbr.rel (0) target = $region29
  $region28: #{tpu_custom_call.1} parent=0 // pred_region
    _
  $region29: #{tpu_custom_call.1} parent=0 // pred_fallthru
    _

</llo_original>
